<compile_context>
chip_gen: v7x
topology: tpu7x:2x2x1
jax: 0.10.0
libtpu: 0.0.40
codegen_flags: <defaults>
</compile_context>

<pallas_src>
import functools

import jax
import jax.numpy as jnp
from jax.experimental import pallas as pl
from jax.experimental.pallas import tpu as pltpu


def _vmem_capacity_bytes():
    """Physical VMEM of the current chip (conservative fallback: 64 MiB)."""
    try:
        info = pltpu.get_tpu_info()
        for name in ("vmem_capacity_bytes", "vmem_size_bytes", "vmem_bytes"):
            val = getattr(info, name, None)
            if val:
                return int(val)
    except Exception:
        pass
    return 64 << 20


_VMEM_CAP = _vmem_capacity_bytes()
# v5e/v6e (128 MiB physical): 40 MiB tile budget, 96 MiB scoped-VMEM limit.
# v7x     ( 64 MiB physical): 24 MiB tile budget, 48 MiB scoped-VMEM limit.
_VMEM_BUDGET = min((_VMEM_CAP * 3) // 8, 40 << 20)
_VMEM_LIMIT = min((_VMEM_CAP * 3) // 4, 96 << 20)


def _round_up(x, m):
    return ((x + m - 1) // m) * m


def _conv2x2_bn_relu_kernel(x_ref, w_ref, s_ref, b_ref, o_ref):
    """One (image, row-chunk) tile of Conv2d(k=2, s=2) + folded BN + ReLU.

    x_ref: (1, tr, 2, Wo, 2*Cin)  bf16; dims = (n, ho, kh, wo, (kw, ci))
    w_ref: (2, Cout, 2*Cin)       bf16; dims = (kh, co, (kw, ci))
    s_ref: (Cout, 1)              f32 folded BN scale (gamma * rsqrt(var+eps))
    b_ref: (Cout, 1)              f32 folded BN bias
    o_ref: (1, Cout, tr*Wo)       out dtype, NCHW orientation
    """
    tr = x_ref.shape[1]
    wo = x_ref.shape[3]
    k2 = x_ref.shape[4]
    s = tr * wo

    # Tap kh=0 / kh=1: each a (tr*Wo, 2*Cin) patch matrix whose lane dim is
    # already the (kw, ci) contraction.  The reshape is a free view when
    # Wo % 8 == 0 (enforced by the tile picker whenever possible).
    x0 = x_ref[0, :, 0, :, :].reshape(s, k2)
    x1 = x_ref[0, :, 1, :, :].reshape(s, k2)

    # (Cout, K) x (S, K) -> (Cout, S): contract both lane dims so the result
    # is produced directly in NCHW orientation (no f32 result transpose).
    dn = (((1,), (1,)), ((), ()))
    acc = jax.lax.dot_general(w_ref[0], x0, dn,
                              preferred_element_type=jnp.float32)
    acc = acc + jax.lax.dot_general(w_ref[1], x1, dn,
                                    preferred_element_type=jnp.float32)
    # TODO(synk): when 2*Cin <= 128 the two taps could be fused into a single
    # K=4*Cin dot (better MXU utilization on v6e/v7x); irrelevant while the
    # kernel is HBM-bound, so it stays as two accumulating dots.

    # Per-channel BN scale/bias applied in f32 on the accumulator, then ReLU.
    y = jnp.maximum(acc * s_ref[...] + b_ref[...], 0.0)
    o_ref[0, :, :] = y.astype(o_ref.dtype)


def _footprint_bytes(t, wo, cin, cout, in_isz, out_isz):
    """Conservative per-step VMEM bytes: double-buffered input/output blocks
    plus the f32 accumulator and matmul temporaries, incl. (8,128) padding."""
    lane_k = _round_up(2 * cin, 128)
    s_pad = _round_up(t * wo, 128)
    x_blk = t * 2 * _round_up(wo, 8) * lane_k * in_isz
    o_blk = _round_up(cout, 8) * s_pad * out_isz
    acc = _round_up(cout, 8) * s_pad * 4                  # f32 accumulator
    x_tmp = 2 * _round_up(t * wo, 8) * lane_k * in_isz    # x0/x1 (+ trans copy)
    return 2 * (x_blk + o_blk) + acc + x_tmp


def _pick_row_tile(n, ho, wo, cin, cout, in_isz, out_isz,
                   budget_bytes=_VMEM_BUDGET):
    """Pick the output-row tile `tr`.

    Preference: tr divides Ho, output block stays lane-dense
    ((tr*Wo) % 128 == 0 or tr == Ho), footprint fits the VMEM budget, and the
    grid keeps >= 4 steps (>= 2 row splits when N == 1) so the pipeline
    overlaps and v7x can shard across both TensorCores -- but never shrink
    the input block below ~2 MiB just to add steps.
    """
    divs = [t for t in range(1, ho + 1) if ho % t == 0]
    aligned = [t for t in divs if (t * wo) % 128 == 0 or t == ho]
    cands = aligned if aligned else divs

    fitting = [t for t in cands
               if _footprint_bytes(t, wo, cin, cout, in_isz, out_isz)
               <= budget_bytes]
    if not fitting:
        # Shrink-to-fit fallback: any divisor that fits, else a single row.
        fitting = [t for t in divs
                   if _footprint_bytes(t, wo, cin, cout, in_isz, out_isz)
                   <= budget_bytes] or [1]

    def x_block_bytes(t):
        return t * 2 * wo * 2 * cin * in_isz

    def enough_steps(t):
        steps = n * (ho // t)
        return steps >= 4 and (n > 1 or ho // t >= 2)

    ok = [t for t in fitting if enough_steps(t)]
    if ok:
        return max(ok)
    # Step floor unreachable (small problem): keep blocks reasonably large.
    big = [t for t in fitting if x_block_bytes(t) >= (2 << 20)]
    return min(big) if big else max(fitting)


def _downsample_core(x_nhwc, w_taps, scale, bias, out_dtype=jnp.float32):
    """Core kernel call.  x_nhwc: (N, 2*Ho, 2*Wo, Cin), ideally bf16.
    Producers that already emit NHWC can call this directly (zero relayout)."""
    N, H, W, Cin = x_nhwc.shape
    Ho, Wo = H // 2, W // 2
    Cout = w_taps.shape[1]

    # Free (contiguous) view: (N, H, W, Cin) -> (N, Ho, kh, Wo, (kw, ci)).
    x5 = x_nhwc.reshape(N, Ho, 2, Wo, 2 * Cin)

    in_isz = jnp.dtype(x_nhwc.dtype).itemsize
    out_isz = jnp.dtype(out_dtype).itemsize
    tr = _pick_row_tile(N, Ho, Wo, Cin, Cout, in_isz, out_isz)
    grid = (N, Ho // tr)

    flops = 2 * N * Ho * Wo * (4 * Cin) * Cout
    bytes_accessed = (x5.size * in_isz
                      + w_taps.size * jnp.dtype(w_taps.dtype).itemsize
                      + (scale.size + bias.size) * 4
                      + N * Cout * Ho * Wo * out_isz)

    out3 = pl.pallas_call(
        _conv2x2_bn_relu_kernel,
        out_shape=jax.ShapeDtypeStruct((N, Cout, Ho * Wo), out_dtype),
        grid_spec=pltpu.PrefetchScalarGridSpec(
            num_scalar_prefetch=0,
            grid=grid,
            in_specs=[
                pl.BlockSpec((1, tr, 2, Wo, 2 * Cin),
                             lambda n, j: (n, j, 0, 0, 0)),
                pl.BlockSpec((2, Cout, 2 * Cin), lambda n, j: (0, 0, 0)),
                pl.BlockSpec((Cout, 1), lambda n, j: (0, 0)),
                pl.BlockSpec((Cout, 1), lambda n, j: (0, 0)),
            ],
            out_specs=pl.BlockSpec((1, Cout, tr * Wo), lambda n, j: (n, 0, j)),
        ),
        compiler_params=pltpu.CompilerParams(
            dimension_semantics=("parallel", "parallel"),
            vmem_limit_bytes=_VMEM_LIMIT),
        cost_estimate=pl.CostEstimate(
            flops=flops, transcendentals=0, bytes_accessed=bytes_accessed),
    )(x5, w_taps, scale, bias)

    # Free reshape back to NCHW (N, Cout, Ho, Wo) -- no output transpose.
    return out3.reshape(N, Cout, Ho, Wo)


@functools.partial(jax.jit, static_argnames=("eps", "out_dtype"))
def downsample_x2(x_nchw, weight, gamma, beta, running_mean, running_var,
                  eps=1e-5, out_dtype=jnp.float32):
    """Forward pass of Downsample_x2 (inference).

    x_nchw : (N, Cin, H, W) float32 (NCHW, PyTorch layout)
    weight : (Cout, Cin, 2, 2)      PyTorch Conv2d weight
    gamma, beta, running_mean, running_var : (Cout,)  BatchNorm2d (eval mode)
    out_dtype : jnp.float32 (default, exact semantics) or jnp.bfloat16 to
                halve output HBM traffic when the consumer tolerates it.
    returns: (N, Cout, H//2, W//2) in out_dtype, NCHW.
    """
    N, Cin, H, W = x_nchw.shape
    Cout = weight.shape[0]
    Ho, Wo = H // 2, W // 2
    compute_dtype = jnp.bfloat16

    # PyTorch Conv2d(k=2, s=2, p=0) silently drops a trailing odd row/column.
    if H != 2 * Ho or W != 2 * Wo:
        x_nchw = x_nchw[:, :, : 2 * Ho, : 2 * Wo]

    # Fold BatchNorm (inference) into a per-channel f32 scale + bias applied
    # on the f32 accumulator *inside* the kernel (weight stays unscaled bf16).
    inv_std = jax.lax.rsqrt(running_var.astype(jnp.float32) + eps)
    scale = (gamma.astype(jnp.float32) * inv_std).reshape(Cout, 1)
    bias = (beta.astype(jnp.float32).reshape(Cout, 1)
            - running_mean.astype(jnp.float32).reshape(Cout, 1) * scale)

    # Conv weight (Cout, Cin, kh, kw) -> (kh, Cout, kw*Cin + ci), bf16,
    # matching the (kw, ci) lane order of the x view used by the kernel.
    w_taps = jnp.transpose(weight.astype(jnp.float32), (2, 0, 3, 1))
    w_taps = w_taps.reshape(2, Cout, 2 * Cin).astype(compute_dtype)

    # Single remaining XLA relayout on the NCHW path: NCHW -> NHWC fused with
    # the bf16 down-cast (one HBM read + write).  See header TODO(synk).
    x_nhwc = jnp.transpose(x_nchw, (0, 2, 3, 1)).astype(compute_dtype)
    return _downsample_core(x_nhwc, w_taps, scale, bias, out_dtype)


def _reference(x_nchw, weight, gamma, beta, running_mean, running_var,
               eps=1e-5):
    """Pure-JAX reference (lax conv) for a sanity check."""
    y = jax.lax.conv_general_dilated(
        x_nchw, weight, window_strides=(2, 2), padding="VALID",
        dimension_numbers=("NCHW", "OIHW", "NCHW"))
    inv_std = 1.0 / jnp.sqrt(running_var + eps)
    scale = (gamma * inv_std)[None, :, None, None]
    bias = (beta - running_mean * gamma * inv_std)[None, :, None, None]
    return jnp.maximum(y * scale + bias, 0.0)


if __name__ == "__main__":
    key = jax.random.PRNGKey(0)
    k_x, k_w, k_g, k_b, k_m, k_v = jax.random.split(key, 6)

    N, Cin, H, W = 2, 4, 16, 16
    Cout = 8

    x = jax.random.normal(k_x, (N, Cin, H, W), dtype=jnp.float32)
    weight = jax.random.normal(k_w, (Cout, Cin, 2, 2), dtype=jnp.float32) * 0.1
    gamma = 1.0 + 0.1 * jax.random.normal(k_g, (Cout,), dtype=jnp.float32)
    beta = 0.05 * jax.random.normal(k_b, (Cout,), dtype=jnp.float32)
    running_mean = 0.1 * jax.random.normal(k_m, (Cout,), dtype=jnp.float32)
    running_var = 1.0 + 0.1 * jax.random.uniform(k_v, (Cout,),
                                                 dtype=jnp.float32)

    out = downsample_x2(x, weight, gamma, beta, running_mean, running_var)
    out = jax.block_until_ready(out)

    ref = _reference(x, weight, gamma, beta, running_mean, running_var)
    assert out.shape == (N, Cout, H // 2, W // 2), out.shape
    # bf16 activations/weights with f32 accumulation -> loose-but-meaningful tol.
    err = float(jnp.max(jnp.abs(out - ref)))
    assert jnp.allclose(out, ref, atol=3e-2, rtol=3e-2), err

    print("KERNEL_OK")
</pallas_src>

<mosaic_0001>
module attributes {stable_mosaic.version = 11 : i64} {
  func.func @_conv2x2_bn_relu_kernel(%arg0: i32, %arg1: i32, %arg2: memref<1x8x2x8x8xbf16, #tpu.memory_space<vmem>>, %arg3: memref<2x8x8xbf16, #tpu.memory_space<vmem>>, %arg4: memref<8x1xf32, #tpu.memory_space<vmem>>, %arg5: memref<8x1xf32, #tpu.memory_space<vmem>>, %arg6: memref<1x8x64xf32, #tpu.memory_space<vmem>>) attributes {dimension_semantics = [#tpu.dimension_semantics<parallel>, #tpu.dimension_semantics<parallel>], iteration_bounds = array<i64: 2, 1>, scalar_prefetch = 0 : i64, scratch_operands = 0 : i64, tpu.core_type = #tpu.core_type<tc>, window_params = [{transform_indices = @transform_0, window_bounds = array<i64: 1, 8, 2, 8, 8>}, {pipeline_mode = #tpu.pipeline_mode<synchronous>, transform_indices = @transform_1, window_bounds = array<i64: 2, 8, 8>}, {pipeline_mode = #tpu.pipeline_mode<synchronous>, transform_indices = @transform_2, window_bounds = array<i64: 8, 1>}, {pipeline_mode = #tpu.pipeline_mode<synchronous>, transform_indices = @transform_3, window_bounds = array<i64: 8, 1>}, {transform_indices = @transform_4, window_bounds = array<i64: 1, 8, 64>}]} {
    %c0 = arith.constant 0 : index
    %c0_0 = arith.constant 0 : index
    %c0_1 = arith.constant 0 : index
    %c0_2 = arith.constant 0 : index
    %c0_3 = arith.constant 0 : index
    %0 = vector.load %arg2[%c0, %c0_0, %c0_1, %c0_2, %c0_3] : memref<1x8x2x8x8xbf16, #tpu.memory_space<vmem>>, vector<1x8x1x8x8xbf16>
    %1 = vector.shape_cast %0 : vector<1x8x1x8x8xbf16> to vector<8x8x8xbf16>
    %2 = vector.shape_cast %1 : vector<8x8x8xbf16> to vector<64x8xbf16>
    %c0_4 = arith.constant 0 : index
    %c0_5 = arith.constant 0 : index
    %c1 = arith.constant 1 : index
    %c0_6 = arith.constant 0 : index
    %c0_7 = arith.constant 0 : index
    %3 = vector.load %arg2[%c0_4, %c0_5, %c1, %c0_6, %c0_7] : memref<1x8x2x8x8xbf16, #tpu.memory_space<vmem>>, vector<1x8x1x8x8xbf16>
    %4 = vector.shape_cast %3 : vector<1x8x1x8x8xbf16> to vector<8x8x8xbf16>
    %5 = vector.shape_cast %4 : vector<8x8x8xbf16> to vector<64x8xbf16>
    %c0_8 = arith.constant 0 : index
    %c0_9 = arith.constant 0 : index
    %c0_10 = arith.constant 0 : index
    %6 = vector.load %arg3[%c0_8, %c0_9, %c0_10] : memref<2x8x8xbf16, #tpu.memory_space<vmem>>, vector<1x8x8xbf16>
    %7 = vector.shape_cast %6 : vector<1x8x8xbf16> to vector<8x8xbf16>
    %cst = arith.constant dense<0.000000e+00> : vector<8x64xf32>
    %8 = tpu.matmul %7, %2, %cst {dimension_numbers = #tpu.dot_dimension_numbers<[1], [1], [0], [0], [0, 0, 1, 0], [], []>} : vector<8x8xbf16>, vector<64x8xbf16>, vector<8x64xf32> -> vector<8x64xf32>
    %c1_11 = arith.constant 1 : index
    %c0_12 = arith.constant 0 : index
    %c0_13 = arith.constant 0 : index
    %9 = vector.load %arg3[%c1_11, %c0_12, %c0_13] : memref<2x8x8xbf16, #tpu.memory_space<vmem>>, vector<1x8x8xbf16>
    %10 = vector.shape_cast %9 : vector<1x8x8xbf16> to vector<8x8xbf16>
    %cst_14 = arith.constant dense<0.000000e+00> : vector<8x64xf32>
    %11 = tpu.matmul %10, %5, %cst_14 {dimension_numbers = #tpu.dot_dimension_numbers<[1], [1], [0], [0], [0, 0, 1, 0], [], []>} : vector<8x8xbf16>, vector<64x8xbf16>, vector<8x64xf32> -> vector<8x64xf32>
    %12 = arith.addf %8, %11 : vector<8x64xf32>
    %c0_15 = arith.constant 0 : index
    %c0_16 = arith.constant 0 : index
    %13 = vector.load %arg4[%c0_15, %c0_16] : memref<8x1xf32, #tpu.memory_space<vmem>>, vector<8x1xf32>
    %14 = vector.broadcast %13 : vector<8x1xf32> to vector<8x64xf32>
    %15 = arith.mulf %12, %14 : vector<8x64xf32>
    %c0_17 = arith.constant 0 : index
    %c0_18 = arith.constant 0 : index
    %16 = vector.load %arg5[%c0_17, %c0_18] : memref<8x1xf32, #tpu.memory_space<vmem>>, vector<8x1xf32>
    %17 = vector.broadcast %16 : vector<8x1xf32> to vector<8x64xf32>
    %18 = arith.addf %15, %17 : vector<8x64xf32>
    %cst_19 = arith.constant 0.000000e+00 : f32
    %19 = vector.broadcast %cst_19 : f32 to vector<8x64xf32>
    %20 = arith.maximumf %18, %19 : vector<8x64xf32>
    %c0_20 = arith.constant 0 : index
    %c0_21 = arith.constant 0 : index
    %c0_22 = arith.constant 0 : index
    %21 = vector.load %arg6[%c0_20, %c0_21, %c0_22] : memref<1x8x64xf32, #tpu.memory_space<vmem>>, vector<1x8x64xf32>
    %22 = vector.shape_cast %21 : vector<1x8x64xf32> to vector<8x64xf32>
    %23 = vector.shape_cast %20 : vector<8x64xf32> to vector<1x8x64xf32>
    tpu.vector_store %arg6[%c0_20, %c0_21, %c0_22], %23 {strides = array<i32>} : memref<1x8x64xf32, #tpu.memory_space<vmem>>, vector<1x8x64xf32>,
    return
  }
  func.func @transform_0(%arg0: i32, %arg1: i32) -> (i32, i32, i32, i32, i32) {
    %c0_i32 = arith.constant 0 : i32
    %c0_i32_0 = arith.constant 0 : i32
    %c0_i32_1 = arith.constant 0 : i32
    %c0_i32_2 = arith.constant 0 : i32
    return %arg0, %arg1, %c0_i32, %c0_i32_0, %c0_i32_1 : i32, i32, i32, i32, i32
  }
  func.func @transform_1(%arg0: i32, %arg1: i32) -> (i32, i32, i32) {
    %c0_i32 = arith.constant 0 : i32
    %c0_i32_0 = arith.constant 0 : i32
    %c0_i32_1 = arith.constant 0 : i32
    %c0_i32_2 = arith.constant 0 : i32
    return %c0_i32, %c0_i32_0, %c0_i32_1 : i32, i32, i32
  }
  func.func @transform_2(%arg0: i32, %arg1: i32) -> (i32, i32) {
    %c0_i32 = arith.constant 0 : i32
    %c0_i32_0 = arith.constant 0 : i32
    %c0_i32_1 = arith.constant 0 : i32
    return %c0_i32, %c0_i32_0 : i32, i32
  }
  func.func @transform_3(%arg0: i32, %arg1: i32) -> (i32, i32) {
    %c0_i32 = arith.constant 0 : i32
    %c0_i32_0 = arith.constant 0 : i32
    %c0_i32_1 = arith.constant 0 : i32
    return %c0_i32, %c0_i32_0 : i32, i32
  }
  func.func @transform_4(%arg0: i32, %arg1: i32) -> (i32, i32, i32) {
    %c0_i32 = arith.constant 0 : i32
    %c0_i32_0 = arith.constant 0 : i32
    return %arg0, %c0_i32, %arg1 : i32, i32, i32
  }
}

</mosaic_0001>

<llo_original>
// kernel: downsample_x2.1
$region0: #{downsample_x2.1}
  #allocation0 [shape = 'u32[]', space=smem, size = 0x4, offset = 0x4, fixed_abs, tag = 'smem constant byte address 0x4 - core index']
  #allocation1 [shape = 'u32[144,128]{1,0:T(1,128)}', space=vmem, size = 0x12000, scoped, tag = 'internal scratch']
  %s0 = inlined_call_operand.vmem [shape: bf16[2,8,2,8,8], index: 0, kind: input, shape index: {}]
  %s1 = inlined_call_operand.vmem [shape: bf16[2,8,8], index: 1, kind: input, shape index: {}]
  %s2 = inlined_call_operand.vmem [shape: f32[8,1], index: 2, kind: input, shape index: {}]
  %s3 = inlined_call_operand.vmem [shape: f32[8,1], index: 3, kind: input, shape index: {}]
  %s4 = inlined_call_operand.vmem [shape: f32[2,8,64], index: 4, kind: output, shape index: {}]
  %s5 = sld [smem:[#allocation0]]
  $region49: #{downsample_x2.1} parent=0
    _
  %s7 = ssub.s32 1, %s5
  %s8 = scalar_select 0, %s7, %s5
  loop: start=0, step=1, limit=4
  $region2: #{downsample_x2.1} parent=0 // loop_pre_header
    _
  $region3: #{downsample_x2.1} parent=0 // loop_header
    %s10 = sphi 0, %s14
    %p11 = scmp.ge.s32.totalorder %s10, 4
    %s17 = sphi 0, %s29
    %s18 = sphi 0, %s25
    %s19 = sphi 0, %s17
    %s20 = sphi 0, %s18
    %s21 = sphi 0, %s19
    %s22 = sphi 0, %s20
    %s34 = sphi 0, %s36
    %s37 = sphi 0, %s34
    %s38 = sphi 0, %s37
    %s54 = sphi 0, %s38
    %s58 = sphi 0, %s58
    %s60 = sphi 0, %s58
    %s61 = sphi 0, %s60
    %s75 = sphi 0, %s61
    %s79 = sphi 0, %s79
    %s81 = sphi 0, %s79
    %s82 = sphi 0, %s81
    %s96 = sphi 0, %s82
    %s100 = sphi 0, %s100
    %s102 = sphi 0, %s100
    %s103 = sphi 0, %s102
    %s117 = sphi 0, %s103
    %s125 = sphi 0, %s127
    %s128 = sphi 0, %s125
    %s129 = sphi 0, %s128
    %s145 = sphi 0, %s129
  $region4: #{downsample_x2.1} parent=0 // loop_header_branch
    %13 = sbr.rel (%p11) target = $region8
  $region5: #{downsample_x2.1} parent=0 // loop_body
    %s15 = ssub.s32 %s10, 1
    %s16 = ssub.s32 %s10, 2
    %s23 = sadd.s32 1, %s18
    %p24 = scmp.ge.s32.totalorder %s23, 1
    %s25 = scalar_select %p24, 0, %s23
    %s26 = sadd.s32 1, %s17
    %s27 = scalar_select %p24, %s26, %s17
    %p28 = scmp.ge.s32.totalorder %s27, 2
    %s29 = scalar_select %p28, 0, %s27
    %s30 = ssub.s32 %s17, %s29
    %s31 = ssub.s32 %s18, %s25
    %s32 = sor.u32 %s30, %s31
    %p33 = scmp.eq.s32.totalorder %s32, 0
    %s35 = sadd.s32 %s34, 1
    %s36 = scalar_select %p33, %s34, %s35
    %p39 = pneg %p33
    %p40 = scmp.eq.s32.totalorder %s10, 1
    %p41 = por %p39, %p40
    %p42 = scmp.ne.s32.totalorder %s34, %s37
    %p43 = scmp.eq.s32.totalorder %s10, 0
    %p44 = por %p42, %p43
    %p45 = scmp.ne.s32.totalorder %s34, %s37
    %p46 = scmp.eq.s32.totalorder %s15, 1
    %p47 = por %p45, %p46
    %p48 = scmp.ne.s32.totalorder %s37, %s38
    %p49 = scmp.eq.s32.totalorder %s15, 0
    %p50 = por %p48, %p49
    %p51 = scmp.ne.s32.totalorder %s37, %s38
    %p52 = scmp.eq.s32.totalorder %s16, 1
    %p53 = por %p51, %p52
    %p55 = scmp.ne.s32.totalorder %s38, %s54
    %p56 = scmp.eq.s32.totalorder %s16, 0
    %p57 = por %p55, %p56
    %s59 = sadd.s32 %s58, 1
    %p62 = scmp.eq.s32.totalorder %s10, 1
    %p63 = scmp.ne.s32.totalorder %s58, %s60
    %p64 = scmp.eq.s32.totalorder %s10, 0
    %p65 = por %p63, %p64
    %p66 = scmp.ne.s32.totalorder %s58, %s60
    %p67 = scmp.eq.s32.totalorder %s15, 1
    %p68 = por %p66, %p67
    %p69 = scmp.ne.s32.totalorder %s60, %s61
    %p70 = scmp.eq.s32.totalorder %s15, 0
    %p71 = por %p69, %p70
    %p72 = scmp.ne.s32.totalorder %s60, %s61
    %p73 = scmp.eq.s32.totalorder %s16, 1
    %p74 = por %p72, %p73
    %p76 = scmp.ne.s32.totalorder %s61, %s75
    %p77 = scmp.eq.s32.totalorder %s16, 0
    %p78 = por %p76, %p77
    %s80 = sadd.s32 %s79, 1
    %p83 = scmp.eq.s32.totalorder %s10, 1
    %p84 = scmp.ne.s32.totalorder %s79, %s81
    %p85 = scmp.eq.s32.totalorder %s10, 0
    %p86 = por %p84, %p85
    %p87 = scmp.ne.s32.totalorder %s79, %s81
    %p88 = scmp.eq.s32.totalorder %s15, 1
    %p89 = por %p87, %p88
    %p90 = scmp.ne.s32.totalorder %s81, %s82
    %p91 = scmp.eq.s32.totalorder %s15, 0
    %p92 = por %p90, %p91
    %p93 = scmp.ne.s32.totalorder %s81, %s82
    %p94 = scmp.eq.s32.totalorder %s16, 1
    %p95 = por %p93, %p94
    %p97 = scmp.ne.s32.totalorder %s82, %s96
    %p98 = scmp.eq.s32.totalorder %s16, 0
    %p99 = por %p97, %p98
    %s101 = sadd.s32 %s100, 1
    %p104 = scmp.eq.s32.totalorder %s10, 1
    %p105 = scmp.ne.s32.totalorder %s100, %s102
    %p106 = scmp.eq.s32.totalorder %s10, 0
    %p107 = por %p105, %p106
    %p108 = scmp.ne.s32.totalorder %s100, %s102
    %p109 = scmp.eq.s32.totalorder %s15, 1
    %p110 = por %p108, %p109
    %p111 = scmp.ne.s32.totalorder %s102, %s103
    %p112 = scmp.eq.s32.totalorder %s15, 0
    %p113 = por %p111, %p112
    %p114 = scmp.ne.s32.totalorder %s102, %s103
    %p115 = scmp.eq.s32.totalorder %s16, 1
    %p116 = por %p114, %p115
    %p118 = scmp.ne.s32.totalorder %s103, %s117
    %p119 = scmp.eq.s32.totalorder %s16, 0
    %p120 = por %p118, %p119
    %s121 = ssub.s32 %s17, %s29
    %s122 = ssub.s32 %s18, %s25
    %s123 = sor.u32 %s121, %s122
    %p124 = scmp.eq.s32.totalorder %s123, 0
    %s126 = sadd.s32 %s125, 1
    %s127 = scalar_select %p124, %s125, %s126
    %p130 = pneg %p124
    %p131 = scmp.eq.s32.totalorder %s10, 1
    %p132 = por %p130, %p131
    %p133 = scmp.ne.s32.totalorder %s125, %s128
    %p134 = scmp.eq.s32.totalorder %s10, 0
    %p135 = por %p133, %p134
    %p136 = scmp.ne.s32.totalorder %s125, %s128
    %p137 = scmp.eq.s32.totalorder %s15, 1
    %p138 = por %p136, %p137
    %p139 = scmp.ne.s32.totalorder %s128, %s129
    %p140 = scmp.eq.s32.totalorder %s15, 0
    %p141 = por %p139, %p140
    %p142 = scmp.ne.s32.totalorder %s128, %s129
    %p143 = scmp.eq.s32.totalorder %s16, 1
    %p144 = por %p142, %p143
    %p146 = scmp.ne.s32.totalorder %s129, %s145
    %p147 = scmp.eq.s32.totalorder %s16, 0
    %p148 = por %p146, %p147
    %p149 = scmp.le.s32.totalorder 1, %s10
    %p150 = scmp.lt.s32.totalorder %s10, 3
    %p151 = pnand %p149, %p150
    %p152 = pneg %p151
    // Predicated region
    $region9: #{downsample_x2.1} parent=5 // pred_check
      _
    $region10: #{downsample_x2.1} parent=5 // pred_check_branch
      %154 = sbr.rel (%p151) target = $region12
    $region11: #{downsample_x2.1} parent=5 // pred_region
      %s155 = ssub.s32 %s10, 1
      // Predicated region
      $region13: #{downsample_x2.1} parent=11 // pred_check
        %p156 = pneg %p71
      $region14: #{downsample_x2.1} parent=11 // pred_check_branch
        %158 = sbr.rel (%p156) target = $region16
      $region15: #{downsample_x2.1} parent=11 // pred_region
        _
      $region16: #{downsample_x2.1} parent=11 // pred_fallthru
        _
      // Predicated region
      $region17: #{downsample_x2.1} parent=11 // pred_check
        %p159 = pneg %p92
      $region18: #{downsample_x2.1} parent=11 // pred_check_branch
        %161 = sbr.rel (%p159) target = $region20
      $region19: #{downsample_x2.1} parent=11 // pred_region
        _
      $region20: #{downsample_x2.1} parent=11 // pred_fallthru
        _
      // Predicated region
      $region21: #{downsample_x2.1} parent=11 // pred_check
        %p162 = pneg %p113
      $region22: #{downsample_x2.1} parent=11 // pred_check_branch
        %164 = sbr.rel (%p162) target = $region24
      $region23: #{downsample_x2.1} parent=11 // pred_region
        _
      $region24: #{downsample_x2.1} parent=11 // pred_fallthru
        _
    $region12: #{downsample_x2.1} parent=5 // pred_fallthru
      _
    %p165 = scmp.lt.s32.totalorder %s10, 2
    // Predicated region
    $region25: #{downsample_x2.1} parent=5 // pred_check
      %p166 = pneg %p165
    $region26: #{downsample_x2.1} parent=5 // pred_check_branch
      %168 = sbr.rel (%p166) target = $region28
    $region27: #{downsample_x2.1} parent=5 // pred_region
      // Predicated region
      $region29: #{downsample_x2.1} parent=27 // pred_check
        %p169 = pneg %p44
      $region30: #{downsample_x2.1} parent=27 // pred_check_branch
        %171 = sbr.rel (%p169) target = $region32
      $region31: #{downsample_x2.1} parent=27 // pred_region
        %s172 = smul.u32 8, %s18
        %p173 = scmp.lt.s32.totalorder %s17, 1
        %s174 = scalar_select %p173, %s17, 1
        %p175 = scmp.lt.s32.totalorder %s172, 7
        %s176 = scalar_select %p175, %s172, 7
        %s177 = smul.addr %s176, 2
        %s178 = smul.addr %s174, 16
        %s179 = sadd.s32 %s177, %s178
        %s180 = smul.addr %s179, 4
        %s181 = scalar_lea.vmem %s0, %s180
        %s182 = smul.u32 8, %s18
      $region32: #{downsample_x2.1} parent=27 // pred_fallthru
        _
    $region28: #{downsample_x2.1} parent=5 // pred_fallthru
      _
    %p183 = scmp.le.s32.totalorder 1, %s10
    %p184 = scmp.lt.s32.totalorder %s10, 3
    %p185 = pnand %p183, %p184
    %p186 = pneg %p185
    // Predicated region
    $region33: #{downsample_x2.1} parent=5 // pred_check
      _
    $region34: #{downsample_x2.1} parent=5 // pred_check_branch
      %188 = sbr.rel (%p185) target = $region36
    $region35: #{downsample_x2.1} parent=5 // pred_region
      %s189 = ssub.s32 %s10, 1
      %s190 = smul.u32 8, %s20
      %p191 = scmp.lt.s32.totalorder %s19, 1
      %s192 = scalar_select %p191, %s19, 1
      %p193 = scmp.lt.s32.totalorder %s190, 7
      %s194 = scalar_select %p193, %s190, 7
      %s195 = smul.addr %s194, 2
      %s196 = smul.addr %s192, 16
      %s197 = sadd.s32 %s195, %s196
      %s198 = smul.addr %s197, 4
      %s199 = scalar_lea.vmem %s0, %s198
      %p200 = pneg %p50
      %p201 = pneg %p47
      %p202 = pneg %p71
      %p203 = pneg %p68
      %p204 = pneg %p92
      %p205 = pneg %p89
      %p206 = pneg %p113
      %p207 = pneg %p110
      %p208 = pneg %p141
      %p209 = pneg %p138
      %p210 = scmp.lt.s32.totalorder %s19, 1
      %s211 = scalar_select %p210, %s19, 1
      %p212 = scmp.lt.s32.totalorder %s20, 0
      %s213 = scalar_select %p212, %s20, 0
      %s214 = sadd.s32 %s213, %s211
      %s215 = smul.addr %s214, 8
      %s216 = scalar_lea.vmem %s4, %s215
      %s217 = smul.u32 8, %s20
      %p218 = scmp.lt.s32.totalorder %s19, 1
      %s219 = scalar_select %p218, %s19, 1
      %p220 = scmp.lt.s32.totalorder %s217, 7
      %s221 = scalar_select %p220, %s217, 7
      %s222 = smul.addr %s221, 2
      %s223 = smul.addr %s219, 16
      %s224 = sadd.s32 %s222, %s223
      %s225 = smul.addr %s224, 4
      %s226 = scalar_lea.vmem %s0, %s225
      %s227 = smul.u32 8, %s20
      %p228 = scmp.lt.s32.totalorder %s19, 1
      %s229 = scalar_select %p228, %s19, 1
      %p230 = scmp.lt.s32.totalorder %s20, 0
      %s231 = scalar_select %p230, %s20, 0
      %s232 = sadd.s32 %s231, %s229
      %s233 = smul.addr %s232, 8
      %s234 = scalar_lea.vmem %s4, %s233
      %v236 = vld [vmem:[%s226] sm:$0xf]
      %v237 = vld [vmem:[%s226 + $0x8] sm:$0xf]
      %v238 = vld [vmem:[%s226 + $0x10] sm:$0xf]
      %v239 = vld [vmem:[%s226 + $0x18] sm:$0xf]
      %v240 = vld [vmem:[%s226 + $0x20] sm:$0xf]
      %v241 = vld [vmem:[%s226 + $0x28] sm:$0xf]
      %v242 = vld [vmem:[%s226 + $0x30] sm:$0xf]
      %v243 = vld [vmem:[%s226 + $0x38] sm:$0xf]
      %s244 = scalar_lea.vmem %s226, 4
      %v245 = vld [vmem:[%s244] sm:$0xf]
      %v246 = vld [vmem:[%s244 + $0x8] sm:$0xf]
      %v247 = vld [vmem:[%s244 + $0x10] sm:$0xf]
      %v248 = vld [vmem:[%s244 + $0x18] sm:$0xf]
      %v249 = vld [vmem:[%s244 + $0x20] sm:$0xf]
      %v250 = vld [vmem:[%s244 + $0x28] sm:$0xf]
      %v251 = vld [vmem:[%s244 + $0x30] sm:$0xf]
      %v252 = vld [vmem:[%s244 + $0x38] sm:$0xf]
      %v253 = vld [vmem:[%s1] sm:$0xf]
      %s254 = scalar_lea.vmem %s1, 4
      %v255 = vld [vmem:[%s254] sm:$0xf]
      %v264 = vunpack.c.l.b16 %v245
      %v265 = vunpack.c.l.b16 %v246
      %v266 = vunpack.c.l.b16 %v247
      %v267 = vunpack.c.l.b16 %v248
      %v268 = vunpack.c.l.b16 %v249
      %v269 = vunpack.c.l.b16 %v250
      %v270 = vunpack.c.l.b16 %v251
      %v271 = vunpack.c.l.b16 %v252
      %v272 = vpack.c.b16 %v265, %v264
      %v273 = vpack.c.b16 %v267, %v266
      %v274 = vpack.c.b16 %v269, %v268
      %v275 = vpack.c.b16 %v271, %v270
      %vm276 = vcmask 64512
      %v278 = vsel %vm276, %v255, 0
      %v281 = vsel %vm276, %v272, 0
      %v284 = vsel %vm276, %v273, 0
      %v287 = vsel %vm276, %v274, 0
      %v290 = vsel %vm276, %v275, 0
      %292 = vmatprep.subr.bf16.mxu0 0
      %293 = vmatpush1.bf16.xpose.msra.mxu0 %v281
      %294 = vmatprep.subr.bf16.mxu0 0
      %295 = vmatpush1.bf16.xpose.msra.mxu0 %v284
      %296 = vmatprep.subr.bf16.mxu0 0
      %297 = vmatpush1.bf16.xpose.msra.mxu0 %v287
      %298 = vmatprep.subr.bf16.mxu0 0
      %299 = vmatpush1.bf16.xpose.msra.mxu0 %v290
      %300 = vmatprep.subr.bf16.mxu0 0
      %301 = vmatpush1.bf16.xpose.msra.mxu0 0
      %302 = vmatprep.subr.bf16.mxu0 0
      %303 = vmatpush1.bf16.xpose.msra.mxu0 0
      %304 = vmatprep.subr.bf16.mxu0 0
      %305 = vmatpush1.bf16.xpose.msra.mxu0 0
      %306 = vmatprep.subr.bf16.mxu0 0
      %307 = vmatpush1.bf16.xpose.msra.mxu0 0
      %308 = vmatprep.subr.bf16.mxu0 0
      %309 = vmatpush1.bf16.xpose.msra.mxu0 0
      %310 = vmatprep.subr.bf16.mxu0 0
      %311 = vmatpush1.bf16.xpose.msra.mxu0 0
      %312 = vmatprep.subr.bf16.mxu0 0
      %313 = vmatpush1.bf16.xpose.msra.mxu0 0
      %314 = vmatprep.subr.bf16.mxu0 0
      %315 = vmatpush1.bf16.xpose.msra.mxu0 0
      %316 = vmatprep.subr.bf16.mxu0 0
      %317 = vmatpush1.bf16.xpose.msra.mxu0 0
      %318 = vmatprep.subr.bf16.mxu0 0
      %319 = vmatpush1.bf16.xpose.msra.mxu0 0
      %320 = vmatprep.subr.bf16.mxu0 0
      %321 = vmatpush1.bf16.xpose.msra.mxu0 0
      %322 = vmatprep.subr.bf16.mxu0 0
      %323 = vmatpush1.bf16.xpose.msra.mxu0 0
      %324 = vmatprep.mubr.bf16.mxu0 0
      %325 = vmatmul.mubr.bf16.gmra.mrb[0].mxu0 %v278
      %v326 = vpop.f32.mrb[0].mxu0
      %v327 = vadd.f32 0.0, %v326
      %v328 = vpop.f32.mrb[0].mxu0
      %v329 = vpop.f32.mrb[0].mxu0
      %v330 = vpop.f32.mrb[0].mxu0
      %331 = vdwg.mxu0
      %v340 = vunpack.c.l.b16 %v236
      %v341 = vunpack.c.l.b16 %v237
      %v342 = vunpack.c.l.b16 %v238
      %v343 = vunpack.c.l.b16 %v239
      %v344 = vunpack.c.l.b16 %v240
      %v345 = vunpack.c.l.b16 %v241
      %v346 = vunpack.c.l.b16 %v242
      %v347 = vunpack.c.l.b16 %v243
      %v348 = vpack.c.b16 %v341, %v340
      %v349 = vpack.c.b16 %v343, %v342
      %v350 = vpack.c.b16 %v345, %v344
      %v351 = vpack.c.b16 %v347, %v346
      %v353 = vsel %vm276, %v253, 0
      %v356 = vsel %vm276, %v348, 0
      %v359 = vsel %vm276, %v349, 0
      %v362 = vsel %vm276, %v350, 0
      %v365 = vsel %vm276, %v351, 0
      %367 = vmatprep.subr.bf16.mxu0 0
      %368 = vmatpush1.bf16.xpose.msra.mxu0 %v356
      %369 = vmatprep.subr.bf16.mxu0 0
      %370 = vmatpush1.bf16.xpose.msra.mxu0 %v359
      %371 = vmatprep.subr.bf16.mxu0 0
      %372 = vmatpush1.bf16.xpose.msra.mxu0 %v362
      %373 = vmatprep.subr.bf16.mxu0 0
      %374 = vmatpush1.bf16.xpose.msra.mxu0 %v365
      %375 = vmatprep.subr.bf16.mxu0 0
      %376 = vmatpush1.bf16.xpose.msra.mxu0 0
      %377 = vmatprep.subr.bf16.mxu0 0
      %378 = vmatpush1.bf16.xpose.msra.mxu0 0
      %379 = vmatprep.subr.bf16.mxu0 0
      %380 = vmatpush1.bf16.xpose.msra.mxu0 0
      %381 = vmatprep.subr.bf16.mxu0 0
      %382 = vmatpush1.bf16.xpose.msra.mxu0 0
      %383 = vmatprep.subr.bf16.mxu0 0
      %384 = vmatpush1.bf16.xpose.msra.mxu0 0
      %385 = vmatprep.subr.bf16.mxu0 0
      %386 = vmatpush1.bf16.xpose.msra.mxu0 0
      %387 = vmatprep.subr.bf16.mxu0 0
      %388 = vmatpush1.bf16.xpose.msra.mxu0 0
      %389 = vmatprep.subr.bf16.mxu0 0
      %390 = vmatpush1.bf16.xpose.msra.mxu0 0
      %391 = vmatprep.subr.bf16.mxu0 0
      %392 = vmatpush1.bf16.xpose.msra.mxu0 0
      %393 = vmatprep.subr.bf16.mxu0 0
      %394 = vmatpush1.bf16.xpose.msra.mxu0 0
      %395 = vmatprep.subr.bf16.mxu0 0
      %396 = vmatpush1.bf16.xpose.msra.mxu0 0
      %397 = vmatprep.subr.bf16.mxu0 0
      %398 = vmatpush1.bf16.xpose.msra.mxu0 0
      %399 = vmatprep.mubr.bf16.mxu0 0
      %400 = vmatmul.mubr.bf16.gmra.mrb[0].mxu0 %v353
      %v401 = vpop.f32.mrb[0].mxu0
      %v402 = vadd.f32 %v327, %v401
      %v403 = vpop.f32.mrb[0].mxu0
      %v404 = vpop.f32.mrb[0].mxu0
      %v405 = vpop.f32.mrb[0].mxu0
      %406 = vdwg.mxu0
      %v407 = vld [vmem:[%s2] sm:$0xff]
      %409 = vset.pattern.permute.xlu0 0
      %410 = vperm.xlu0 %409, %v407
      %v411 = vpop.permute.xlu0 %410
      %v413 = vmul.f32 %v402, %v411
      %v414 = vld [vmem:[%s3] sm:$0xff]
      %416 = vset.pattern.permute.xlu0 0
      %417 = vperm.xlu0 %416, %v414
      %v418 = vpop.permute.xlu0 %417
      %v420 = vadd.f32 %v413, %v418
      %v421 = vmax.f32 %v420, 0.0
      %vm422 = vcmask 523264
      %423 = vst.msk [vmem:[%s234] sm:$0xff] %vm422, %v421
      %p424 = scmp.lt.s32.totalorder %s19, 1
      %s425 = scalar_select %p424, %s19, 1
      %p426 = scmp.lt.s32.totalorder %s20, 0
      %s427 = scalar_select %p426, %s20, 0
      %s428 = sadd.s32 %s427, %s425
      %s429 = smul.addr %s428, 8
      %s430 = scalar_lea.vmem %s4, %s429
      // Predicated region
      $region37: #{downsample_x2.1} parent=35 // pred_check
        %p431 = pneg %p138
      $region38: #{downsample_x2.1} parent=35 // pred_check_branch
        %433 = sbr.rel (%p431) target = $region40
      $region39: #{downsample_x2.1} parent=35 // pred_region
        _
      $region40: #{downsample_x2.1} parent=35 // pred_fallthru
        _
    $region36: #{downsample_x2.1} parent=5 // pred_fallthru
      _
    %p434 = scmp.le.s32.totalorder 2, %s10
    // Predicated region
    $region41: #{downsample_x2.1} parent=5 // pred_check
      %p435 = pneg %p434
    $region42: #{downsample_x2.1} parent=5 // pred_check_branch
      %437 = sbr.rel (%p435) target = $region44
    $region43: #{downsample_x2.1} parent=5 // pred_region
      %s438 = ssub.s32 %s10, 2
      // Predicated region
      $region45: #{downsample_x2.1} parent=43 // pred_check
        %p439 = pneg %p144
      $region46: #{downsample_x2.1} parent=43 // pred_check_branch
        %441 = sbr.rel (%p439) target = $region48
      $region47: #{downsample_x2.1} parent=43 // pred_region
        %p442 = scmp.lt.s32.totalorder %s21, 1
        %s443 = scalar_select %p442, %s21, 1
        %p444 = scmp.lt.s32.totalorder %s22, 0
        %s445 = scalar_select %p444, %s22, 0
        %s446 = sadd.s32 %s445, %s443
        %s447 = smul.addr %s446, 8
        %s448 = scalar_lea.vmem %s4, %s447
      $region48: #{downsample_x2.1} parent=43 // pred_fallthru
        _
    $region44: #{downsample_x2.1} parent=5 // pred_fallthru
      _
  $region6: #{downsample_x2.1} parent=0 // loop_footer
    %s14 = sadd.s32 1, %s10
  $region7: #{downsample_x2.1} parent=0 // loop_footer_branch
    %9 = sbr.rel target = $region3
  $region8: #{downsample_x2.1} parent=0 // loop_exit
    _

</llo_original>
